<compile_context>
chip_gen: v6e
topology: v6e:2x2x1
jax: 0.10.0
libtpu: 0.0.40
codegen_flags: <defaults>
</compile_context>

<pallas_src>
import jax
import jax.numpy as jnp
from jax.experimental import pallas as pl
from jax.experimental.pallas import tpu as pltpu

_LANES = 128
_MIB = 1024 * 1024


def _sublane_multiple(dtype) -> int:
    """Dtype-native sublane packing multiple for the second-to-last dim."""
    itemsize = jnp.dtype(dtype).itemsize
    if itemsize >= 4:
        return 8
    if itemsize == 2:
        return 16
    return 32


def _target_tile_bytes() -> int:
    """Per-block byte budget; bigger on v7x where HBM is ~3.2 TB/s and the
    fixed per-grid-step cost would otherwise dominate."""
    try:
        kind = jax.devices()[0].device_kind.lower()
    except Exception:  # pragma: no cover - defensive, keep kernel usable
        kind = ""
    return 8 * _MIB if "v7" in kind else 4 * _MIB


def _swish_kernel(x_ref, o_ref):
    x = x_ref[...]
    xf = x.astype(jnp.float32)  # f32 compute for parity with the PyTorch ref
    o_ref[...] = (xf * jax.nn.sigmoid(xf)).astype(o_ref.dtype)


def _swish_2d(x2d: jax.Array) -> jax.Array:
    """Swish over a (rows, 128) lane-dense slab via a pipelined Pallas grid."""
    rows = x2d.shape[0]
    dtype = x2d.dtype
    itemsize = jnp.dtype(dtype).itemsize
    sub = _sublane_multiple(dtype)

    target_rows = max(sub, _target_tile_bytes() // (_LANES * itemsize))
    target_rows = (target_rows // sub) * sub

    if rows < 64:
        # Tiny input: one block covering the full slab (always a legal block
        # shape since it equals the full array dims).
        block_rows = rows
        grid = (1,)
    else:
        # Medium/large: at least 4 blocks so the load/compute/store pipeline
        # (and, on v7x, both TensorCores) are actually exercised; cap the
        # block at the generation-aware target tile size.
        block_rows = min(target_rows, (rows // 4 // sub) * sub)
        block_rows = max(sub, block_rows)
        grid = (pl.cdiv(rows, block_rows),)

    block_bytes = block_rows * _LANES * itemsize
    # in + out, double-buffered, plus headroom; <= 56 MiB so it also fits
    # under v7x's 64 MiB physical VMEM.
    vmem_limit = int(min(56 * _MIB, 4 * block_bytes + 16 * _MIB))

    return pl.pallas_call(
        _swish_kernel,
        out_shape=jax.ShapeDtypeStruct((rows, _LANES), dtype),
        grid_spec=pltpu.PrefetchScalarGridSpec(
            num_scalar_prefetch=0,
            grid=grid,
            in_specs=[pl.BlockSpec((block_rows, _LANES), lambda i: (i, 0))],
            out_specs=pl.BlockSpec((block_rows, _LANES), lambda i: (i, 0)),
        ),
        compiler_params=pltpu.CompilerParams(
            dimension_semantics=("parallel",),  # shards across v7x's 2 TCs
            vmem_limit_bytes=vmem_limit,
        ),
    )(x2d)


def swish(x: jax.Array) -> jax.Array:
    """Elementwise x * sigmoid(x) via a Pallas TPU kernel. Works on any shape."""
    orig_shape = x.shape
    total = x.size
    if total == 0:
        return x

    x_flat = jnp.reshape(x, (-1,))
    rem = total % _LANES
    aligned = total - rem

    if rem == 0:
        # Fast path (typical conv activations): pure zero-copy reshape.
        out = _swish_2d(jnp.reshape(x_flat, (total // _LANES, _LANES)))
        return jnp.reshape(out, orig_shape)

    # Ragged path: Pallas handles the 128-aligned prefix; the <128-element
    # tail goes through plain XLA (no full-array pad / slice round trips).
    tail = x_flat[aligned:]
    tail_f = tail.astype(jnp.float32)
    tail_out = (tail_f * jax.nn.sigmoid(tail_f)).astype(x.dtype)

    if aligned == 0:
        out_flat = tail_out
    else:
        prefix = jnp.reshape(x_flat[:aligned], (aligned // _LANES, _LANES))
        prefix_out = jnp.reshape(_swish_2d(prefix), (-1,))
        out_flat = jnp.concatenate([prefix_out, tail_out])
    return jnp.reshape(out_flat, orig_shape)


if __name__ == "__main__":
    key = jax.random.PRNGKey(0)

    # NCHW activation-like input: (2, 4, 16, 16) -> 2048 elems (128-multiple,
    # tiny single-block path).
    x = jax.random.normal(key, (2, 4, 16, 16), dtype=jnp.float32)
    y = jax.block_until_ready(swish(x))
    ref = x * jax.nn.sigmoid(x)
    assert y.shape == x.shape and y.dtype == x.dtype
    assert jnp.allclose(y, ref, atol=1e-6, rtol=1e-6)

    # Larger 128-multiple shape to exercise the multi-block pipelined path
    # (256 rows -> >= 4 blocks).
    x_big = jax.random.normal(jax.random.PRNGKey(2), (4, 8, 32, 32),
                              dtype=jnp.float32)
    y_big = jax.block_until_ready(swish(x_big))
    ref_big = x_big * jax.nn.sigmoid(x_big)
    assert jnp.allclose(y_big, ref_big, atol=1e-6, rtol=1e-6)

    # Non-128-multiple shape to exercise the ragged-tail path.
    x_odd = jax.random.normal(jax.random.PRNGKey(1), (3, 5, 7),
                              dtype=jnp.float32)
    y_odd = jax.block_until_ready(swish(x_odd))
    ref_odd = x_odd * jax.nn.sigmoid(x_odd)
    assert jnp.allclose(y_odd, ref_odd, atol=1e-6, rtol=1e-6)

    print("KERNEL_OK")
</pallas_src>

<mosaic_0001>
module attributes {stable_mosaic.version = 11 : i64} {
  func.func @_swish_kernel(%arg0: i32, %arg1: memref<16x128xf32, #tpu.memory_space<vmem>>, %arg2: memref<16x128xf32, #tpu.memory_space<vmem>>) attributes {dimension_semantics = [#tpu.dimension_semantics<parallel>], iteration_bounds = array<i64: 1>, scalar_prefetch = 0 : i64, scratch_operands = 0 : i64, tpu.core_type = #tpu.core_type<tc>, window_params = [{transform_indices = @transform_0, window_bounds = array<i64: 16, 128>}, {transform_indices = @transform_1, window_bounds = array<i64: 16, 128>}]} {
    %c0 = arith.constant 0 : index
    %c0_0 = arith.constant 0 : index
    %0 = vector.load %arg1[%c0, %c0_0] : memref<16x128xf32, #tpu.memory_space<vmem>>, vector<16x128xf32>
    %1 = arith.negf %0 : vector<16x128xf32>
    %2 = math.exp %1 : vector<16x128xf32>
    %cst = arith.constant 1.000000e+00 : f32
    %3 = vector.broadcast %cst : f32 to vector<16x128xf32>
    %4 = arith.addf %3, %2 : vector<16x128xf32>
    %5 = arith.divf %3, %4 : vector<16x128xf32>
    %6 = arith.mulf %0, %5 : vector<16x128xf32>
    %c0_1 = arith.constant 0 : index
    %c0_2 = arith.constant 0 : index
    %7 = vector.load %arg2[%c0_1, %c0_2] : memref<16x128xf32, #tpu.memory_space<vmem>>, vector<16x128xf32>
    tpu.vector_store %arg2[%c0_1, %c0_2], %6 {strides = array<i32>} : memref<16x128xf32, #tpu.memory_space<vmem>>, vector<16x128xf32>,
    return
  }
  func.func @transform_0(%arg0: i32) -> (i32, i32) {
    %c0_i32 = arith.constant 0 : i32
    %c0_i32_0 = arith.constant 0 : i32
    return %arg0, %c0_i32 : i32, i32
  }
  func.func @transform_1(%arg0: i32) -> (i32, i32) {
    %c0_i32 = arith.constant 0 : i32
    %c0_i32_0 = arith.constant 0 : i32
    return %arg0, %c0_i32 : i32, i32
  }
}

</mosaic_0001>

<llo_original>
// kernel: tpu_custom_call.1
$region0: #{tpu_custom_call.1}
  #allocation0 [shape = 'u32[]', space=smem, size = 0x4, offset = 0x4, fixed_abs, tag = 'smem constant byte address 0x4 - core index']
  #allocation1 [shape = 'u32[144,128]{1,0:T(1,128)}', space=vmem, size = 0x12000, scoped, tag = 'internal scratch']
  %s0 = inlined_call_operand.hbm [shape: f32[16,128], index: 0, kind: input, shape index: {}]
  %s1 = inlined_call_operand.hbm [shape: f32[16,128], index: 1, kind: output, shape index: {}]
  %s2 = sld [smem:[#allocation0]]
  $region18: #{tpu_custom_call.1} parent=0
    _
  %s4 = ssub.s32 1, %s2
  %s5 = scalar_select 0, %s4, %s2
  $region1: #{tpu_custom_call.1} parent=0
    #allocation2 [shape = 'u8[8192]{0}', space=vmem, size = 0x2000, scoped, tag = 'input window, operand 0, single buffered']
    #allocation3 [shape = 's32[1]{0}', space=sflag, size = 0x4, scoped, tag = 'scoped memory for tpu_custom_call.1']
    #allocation4 [shape = 's32[1]{0}', space=sflag, size = 0x4, scoped, tag = 'scoped memory for tpu_custom_call.1']
    #allocation5 [shape = 'u8[8192]{0}', space=vmem, size = 0x2000, scoped, tag = 'output window, operand 0, single buffered']
    %6 = vsyncpa [#allocation3], 0
    %7 = vsyncpa [#allocation4], 0
    // Predicated region
    $region2: #{tpu_custom_call.1} parent=1 // pred_check
      _
    $region3: #{tpu_custom_call.1} parent=1 // pred_check_branch
      %9 = sbr.rel (0) target = $region5
    $region4: #{tpu_custom_call.1} parent=1 // pred_region
      %s11 = ssub.s32 256, 256
      %12 = vsyncadd [#allocation3], %s11
      %s13 = sshll.u32 [#allocation2], 4
      %s14 = int_to_ptr.vmem [resolvable:$true] %s13
      %19 = dma.hbm_to_vmem [thread:$0]  %s0, 256, %s14, [#allocation3], 128, 128, 8
    $region5: #{tpu_custom_call.1} parent=1 // pred_fallthru
      _
    // Predicated region
    $region6: #{tpu_custom_call.1} parent=1 // pred_check
      _
    $region7: #{tpu_custom_call.1} parent=1 // pred_check_branch
      %21 = sbr.rel (0) target = $region9
    $region8: #{tpu_custom_call.1} parent=1 // pred_region
      %22 = dma.done [#allocation3], 256
    $region9: #{tpu_custom_call.1} parent=1 // pred_fallthru
      _
    %v23 = vld [vmem:[#allocation2] sm:$0xff]
    %v24 = vld [vmem:[#allocation2 + $0x8] sm:$0xff]
    %v25 = vxor.u32 %v23, 2147483648
    %v26 = vxor.u32 %v24, 2147483648
    %v27 = vmul.f32 %v25, 1.442695
    %v28 = vpow.pop %v27
    %v29 = vmul.f32 %v26, 1.442695
    %v30 = vpow.pop %v29
    %v31 = vadd.f32 %v28, 1.0
    %v32 = vadd.f32 %v30, 1.0
    %v33 = vrcp.pop %v31
    %v34 = vmul.f32 1.0, %v33
    %v35 = vrcp.pop %v32
    %v36 = vmul.f32 1.0, %v35
    %v37 = vmul.f32 %v23, %v34
    %v38 = vmul.f32 %v24, %v36
    %39 = vst [vmem:[#allocation5] sm:$0xff] %v37
    %40 = vst [vmem:[#allocation5 + $0x8] sm:$0xff] %v38
    // Predicated region
    $region10: #{tpu_custom_call.1} parent=1 // pred_check
      _
    $region11: #{tpu_custom_call.1} parent=1 // pred_check_branch
      %42 = sbr.rel (0) target = $region13
    $region12: #{tpu_custom_call.1} parent=1 // pred_region
      %s44 = ssub.s32 256, 256
      %45 = vsyncadd [#allocation4], %s44
      %s46 = sshll.u32 [#allocation5], 4
      %s47 = int_to_ptr.vmem [resolvable:$true] %s46
      %52 = dma.vmem_to_hbm [thread:$0]  %s47, 256, %s1, [#allocation4], 128, 128, 8
    $region13: #{tpu_custom_call.1} parent=1 // pred_fallthru
      _
    // Predicated region
    $region14: #{tpu_custom_call.1} parent=1 // pred_check
      _
    $region15: #{tpu_custom_call.1} parent=1 // pred_check_branch
      %54 = sbr.rel (0) target = $region17
    $region16: #{tpu_custom_call.1} parent=1 // pred_region
      %55 = dma.done [#allocation4], 256
    $region17: #{tpu_custom_call.1} parent=1 // pred_fallthru
      _
    %56 = vsyncpa [#allocation3], 1
    %57 = vsyncpa [#allocation4], 1

</llo_original>
